<compile_context>
chip_gen: v5e
topology: v5e:2x2
jax: 0.10.0
libtpu: 0.0.40
codegen_flags: <defaults>
</compile_context>

<pallas_src>
import functools

import jax
import jax.numpy as jnp
from jax import lax
from jax.experimental import pallas as pl
from jax.experimental.pallas import tpu as pltpu

_LANE = 128
_SUBLANE = 8
_MAX_ROW_TILE = 512  # cap on rows of the flattened B*S axis per grid step


def _round_up(x: int, m: int) -> int:
    return (x + m - 1) // m * m


def _ceil_div(a: int, b: int) -> int:
    return -(-a // b)


def _vmem_budget() -> int:
    """Scoped-VMEM budget (bytes): ~75% of this generation's physical VMEM.

    v5e/v6e (128 MiB) -> 96 MiB, v7x (64 MiB per TC) -> 48 MiB.
    """
    cap = 64 * 1024 * 1024
    try:
        cap = int(pltpu.get_tpu_info().vmem_capacity_bytes)
    except Exception:
        pass
    return int(cap * 3 // 4)


def _choose_m_tile(m: int, per_row_bytes: int, row_budget_bytes: int) -> int:
    """Sublane-aligned row tile: as big as VMEM allows, capped at _MAX_ROW_TILE,
    and small enough that the grid keeps >=2 steps (so "parallel" can shard
    across v7x's two TensorCores even for small inputs)."""
    if m <= _SUBLANE:
        return max(m, 1)
    row_budget_bytes = max(row_budget_bytes, per_row_bytes * _SUBLANE)
    by_vmem = max(
        _SUBLANE,
        (row_budget_bytes // max(per_row_bytes, 1)) // _SUBLANE * _SUBLANE,
    )
    t = min(_MAX_ROW_TILE, by_vmem, _round_up(m, _SUBLANE))
    if _ceil_div(m, t) < 2:
        t = max(_SUBLANE, _round_up(_ceil_div(m, 2), _SUBLANE))
    return t


# ---------------------------------------------------------------------------
# Integer-id path: build the one-hot in-register (iota compare) and contract
# on the MXU against the resident weight.  Fully vectorized, 2-D layouts,
# unmasked full-width output stores.
# ---------------------------------------------------------------------------
def _token_embed_kernel(ids_ref, w_ref, out_ref):
    """out[r] = W[ids[r]]  (== onehot(ids) @ W).

    ids_ref : [Mt, 1] int32   (VMEM, per-tile)
    w_ref   : [V, E]  f32     (VMEM, resident across the grid)
    out_ref : [Mt, E] f32
    """
    ids = ids_ref[...]                                   # (Mt, 1)
    mt = ids.shape[0]
    v = w_ref.shape[0]
    col = lax.broadcasted_iota(jnp.int32, (mt, v), 1)    # (Mt, V)
    onehot = (col == ids).astype(w_ref.dtype)            # OOB id -> all-zero row
    out_ref[...] = jnp.dot(
        onehot, w_ref[...], preferred_element_type=jnp.float32
    ).astype(out_ref.dtype)


# ---------------------------------------------------------------------------
# Float (one-hot / DeepLiftSHAP attribution) path.
# ---------------------------------------------------------------------------
def _linear_resident_kernel(x_ref, w_ref, out_ref):
    """out = x @ W with the whole weight resident in VMEM (small vocab)."""
    out_ref[...] = jnp.dot(
        x_ref[...], w_ref[...], preferred_element_type=jnp.float32
    ).astype(out_ref.dtype)


def _linear_ktiled_kernel(x_ref, w_ref, out_ref, acc_ref):
    """Canonical K-tiled matmul with an f32 VMEM accumulator (W streamed)."""
    @pl.when(pl.program_id(1) == 0)
    def _init():
        acc_ref[...] = jnp.zeros_like(acc_ref)

    acc_ref[...] += jnp.dot(
        x_ref[...], w_ref[...], preferred_element_type=jnp.float32
    )

    @pl.when(pl.program_id(1) == pl.num_programs(1) - 1)
    def _store():
        out_ref[...] = acc_ref[...].astype(out_ref.dtype)


@functools.partial(jax.jit, static_argnames=("force_k_tiling",))
def plm_wrapper_forward(input_ids, attention_mask, shared_weight, *,
                        force_k_tiling: bool = False):
    """Forward pass of PLM_wrapper_for_visualization (embedding stage).

    input_ids      : [B, S] int   token ids   (or [B, S, V] float one-hot)
    attention_mask : [B, S] int   (passed through to the wrapped LM)
    shared_weight  : [V, E] f32   (lm.shared.weight)
    returns        : [B, S, E] f32 embedded inputs
    """
    V, E = shared_weight.shape
    budget = _vmem_budget()

    if jnp.issubdtype(input_ids.dtype, jnp.integer):
        # ---- integer-id path: in-kernel one-hot + MXU contraction ----------
        B, S = input_ids.shape
        M = B * S
        ids2 = jnp.reshape(input_ids.astype(jnp.int32), (M, 1))
        w = shared_weight.astype(jnp.float32)   # keep f32: near-exact lookup

        # TODO(synk): for very large vocabularies where the resident [V, E]
        # weight exceeds the VMEM budget, stream W from HBM
        # (memory_space=pl.ANY) with a per-tile DMA row gather / K-tiled
        # one-hot contraction instead of keeping it resident.
        resident_bytes = 2 * V * E * 4          # double-buffered resident W
        per_row = V * 4 + 2 * E * 4 + 2 * 4     # in-kernel onehot + out + ids
        m_tile = _choose_m_tile(M, per_row, budget - resident_bytes)

        out = pl.pallas_call(
            _token_embed_kernel,
            out_shape=jax.ShapeDtypeStruct((M, E), jnp.float32),
            grid_spec=pl.GridSpec(
                grid=(_ceil_div(M, m_tile),),
                in_specs=[
                    pl.BlockSpec((m_tile, 1), lambda i: (i, 0)),
                    pl.BlockSpec((V, E), lambda i: (0, 0)),
                ],
                out_specs=pl.BlockSpec((m_tile, E), lambda i: (i, 0)),
            ),
            compiler_params=pltpu.CompilerParams(
                dimension_semantics=("parallel",),
                vmem_limit_bytes=budget,
            ),
        )(ids2, w)
        embedded = out.reshape(B, S, E)
    else:
        # ---- float one-hot (attribution) path -------------------------------
        B, S, Vi = input_ids.shape
        if Vi != V:
            raise ValueError(
                f"one-hot width {Vi} does not match vocabulary size {V}")
        M = B * S
        # One-hot values are exact in bf16; bf16 halves HBM/VMEM bytes and runs
        # at the full MXU rate on v6e/v7x.  Accumulate in f32.
        x = jnp.reshape(input_ids, (M, Vi)).astype(jnp.bfloat16)
        w = shared_weight.astype(jnp.bfloat16)

        resident_bytes = 2 * V * E * 2          # double-buffered resident W
        use_resident = (not force_k_tiling) and (resident_bytes <= budget // 3)

        if use_resident:
            per_row = 2 * Vi * 2 + 2 * E * 4
            m_tile = _choose_m_tile(M, per_row, budget - resident_bytes)
            out = pl.pallas_call(
                _linear_resident_kernel,
                out_shape=jax.ShapeDtypeStruct((M, E), jnp.float32),
                grid_spec=pl.GridSpec(
                    grid=(_ceil_div(M, m_tile),),
                    in_specs=[
                        pl.BlockSpec((m_tile, Vi), lambda i: (i, 0)),
                        pl.BlockSpec((V, E), lambda i: (0, 0)),
                    ],
                    out_specs=pl.BlockSpec((m_tile, E), lambda i: (i, 0)),
                ),
                compiler_params=pltpu.CompilerParams(
                    dimension_semantics=("parallel",),
                    vmem_limit_bytes=budget,
                ),
            )(x, w)
        else:
            # K-tiled streaming matmul (W no longer resident).
            k_tile = None
            for cand in (512, 256, 128):
                if V % cand == 0:
                    k_tile = cand
                    break
            if k_tile is None:
                # TODO(synk): mask the ragged last K block in-kernel instead of
                # materializing a padded copy of the one-hot activation.
                V_pad = _round_up(V, _LANE)
                x = jnp.pad(x, ((0, 0), (0, V_pad - Vi)))
                w = jnp.pad(w, ((0, V_pad - V), (0, 0)))
                k_tile = _LANE
                Vk = V_pad
            else:
                Vk = V

            per_row = 2 * k_tile * 2 + 3 * E * 4   # x tiles + out tiles + acc
            fixed = 2 * k_tile * E * 2             # double-buffered W tile
            m_tile = _choose_m_tile(M, per_row, budget - fixed)

            out = pl.pallas_call(
                _linear_ktiled_kernel,
                out_shape=jax.ShapeDtypeStruct((M, E), jnp.float32),
                grid_spec=pltpu.PrefetchScalarGridSpec(
                    num_scalar_prefetch=0,
                    grid=(_ceil_div(M, m_tile), Vk // k_tile),
                    in_specs=[
                        pl.BlockSpec((m_tile, k_tile), lambda i, k: (i, k)),
                        pl.BlockSpec((k_tile, E), lambda i, k: (k, 0)),
                    ],
                    out_specs=pl.BlockSpec((m_tile, E), lambda i, k: (i, 0)),
                    scratch_shapes=[pltpu.VMEM((m_tile, E), jnp.float32)],
                ),
                compiler_params=pltpu.CompilerParams(
                    dimension_semantics=("parallel", "arbitrary"),
                    vmem_limit_bytes=budget,
                ),
            )(x, w)
        embedded = out.reshape(B, S, E)

    # TODO(synk): the wrapped language model call
    #   self.lm(inputs_embeds=embedded, attention_mask=attention_mask)
    # is an arbitrary pretrained transformer and is not reproducible here;
    # the wrapper returns the embedded inputs (attention_mask is unused).
    del attention_mask
    return embedded


if __name__ == "__main__":
    key = jax.random.PRNGKey(0)
    k_w, k_ids, k_w2, k_ids2 = jax.random.split(key, 4)

    # --- Config 1: small shapes consistent with the module -------------------
    # num_tokens (vocab) V = 32, output_emb_size E = 64, batch B = 2, seq S = 8
    B, S, V, E = 2, 8, 32, 64
    shared_weight = jax.random.normal(k_w, (V, E), dtype=jnp.float32) * 0.02
    input_ids = jax.random.randint(k_ids, (B, S), 0, V, dtype=jnp.int32)
    attention_mask = jnp.ones((B, S), dtype=jnp.int32)
    ref = shared_weight[input_ids]                                # [B, S, E]

    # Integer-id path (in-kernel one-hot + resident-W MXU contraction).
    out_int = jax.block_until_ready(
        plm_wrapper_forward(input_ids, attention_mask, shared_weight))
    assert out_int.shape == (B, S, E), out_int.shape
    assert jnp.allclose(out_int, ref, atol=2e-3, rtol=2e-3), "int path mismatch"

    # Float one-hot path (resident-W bf16 matmul) — DeepLiftSHAP branch.
    onehot = jax.nn.one_hot(input_ids, V, dtype=jnp.float32)
    out_float = jax.block_until_ready(
        plm_wrapper_forward(onehot, attention_mask, shared_weight))
    assert out_float.shape == (B, S, E), out_float.shape
    assert jnp.allclose(out_float, ref, atol=1e-2, rtol=2e-2), "float path mismatch"

    # --- Config 2: exercise the K-tiled (streamed-weight) float path ----------
    B2, S2, V2, E2 = 2, 16, 768, 128
    shared_weight2 = jax.random.normal(k_w2, (V2, E2), dtype=jnp.float32) * 0.02
    input_ids2 = jax.random.randint(k_ids2, (B2, S2), 0, V2, dtype=jnp.int32)
    attention_mask2 = jnp.ones((B2, S2), dtype=jnp.int32)
    onehot2 = jax.nn.one_hot(input_ids2, V2, dtype=jnp.float32)
    ref2 = shared_weight2[input_ids2]

    out_kt = jax.block_until_ready(
        plm_wrapper_forward(onehot2, attention_mask2, shared_weight2,
                            force_k_tiling=True))
    assert out_kt.shape == (B2, S2, E2), out_kt.shape
    assert jnp.allclose(out_kt, ref2, atol=1e-2, rtol=2e-2), "k-tiled path mismatch"

    print("KERNEL_OK")
</pallas_src>

<mosaic_0001>
module attributes {stable_mosaic.version = 11 : i64} {
  func.func @_token_embed_kernel(%arg0: i32, %arg1: memref<8x1xi32, #tpu.memory_space<vmem>>, %arg2: memref<32x64xf32, #tpu.memory_space<vmem>>, %arg3: memref<8x64xf32, #tpu.memory_space<vmem>>) attributes {dimension_semantics = [#tpu.dimension_semantics<parallel>], iteration_bounds = array<i64: 2>, scalar_prefetch = 0 : i64, scratch_operands = 0 : i64, tpu.core_type = #tpu.core_type<tc>, window_params = [{transform_indices = @transform_0, window_bounds = array<i64: 8, 1>}, {pipeline_mode = #tpu.pipeline_mode<synchronous>, transform_indices = @transform_1, window_bounds = array<i64: 32, 64>}, {transform_indices = @transform_2, window_bounds = array<i64: 8, 64>}]} {
    %c0 = arith.constant 0 : index
    %c0_0 = arith.constant 0 : index
    %0 = vector.load %arg1[%c0, %c0_0] : memref<8x1xi32, #tpu.memory_space<vmem>>, vector<8x1xi32>
    %1 = tpu.iota {dimensions = array<i32: 1>} : vector<8x32xi32>
    %2 = vector.broadcast %0 : vector<8x1xi32> to vector<8x32xi32>
    %3 = arith.cmpi eq, %1, %2 : vector<8x32xi32>
    %4 = arith.extui %3 : vector<8x32xi1> to vector<8x32xi32>
    %5 = arith.sitofp %4 : vector<8x32xi32> to vector<8x32xf32>
    %c0_1 = arith.constant 0 : index
    %c0_2 = arith.constant 0 : index
    %6 = vector.load %arg2[%c0_1, %c0_2] : memref<32x64xf32, #tpu.memory_space<vmem>>, vector<32x64xf32>
    %cst = arith.constant dense<0.000000e+00> : vector<8x64xf32>
    %7 = tpu.matmul %5, %6, %cst {dimension_numbers = #tpu.dot_dimension_numbers<[1], [0], [0], [1], [0, 0, 1, 1], [], []>} : vector<8x32xf32>, vector<32x64xf32>, vector<8x64xf32> -> vector<8x64xf32>
    %c0_3 = arith.constant 0 : index
    %c0_4 = arith.constant 0 : index
    %8 = vector.load %arg3[%c0_3, %c0_4] : memref<8x64xf32, #tpu.memory_space<vmem>>, vector<8x64xf32>
    tpu.vector_store %arg3[%c0_3, %c0_4], %7 {strides = array<i32>} : memref<8x64xf32, #tpu.memory_space<vmem>>, vector<8x64xf32>,
    return
  }
  func.func @transform_0(%arg0: i32) -> (i32, i32) {
    %c0_i32 = arith.constant 0 : i32
    %c0_i32_0 = arith.constant 0 : i32
    return %arg0, %c0_i32 : i32, i32
  }
  func.func @transform_1(%arg0: i32) -> (i32, i32) {
    %c0_i32 = arith.constant 0 : i32
    %c0_i32_0 = arith.constant 0 : i32
    %c0_i32_1 = arith.constant 0 : i32
    return %c0_i32, %c0_i32_0 : i32, i32
  }
  func.func @transform_2(%arg0: i32) -> (i32, i32) {
    %c0_i32 = arith.constant 0 : i32
    %c0_i32_0 = arith.constant 0 : i32
    return %arg0, %c0_i32 : i32, i32
  }
}

</mosaic_0001>

<llo_original>
// kernel: plm_wrapper_forward.1
$region0: #{plm_wrapper_forward.1}
  #allocation0 [shape = 'u32[]', space=smem, size = 0x4, offset = 0x4, fixed_abs, tag = 'smem constant byte address 0x4 - core index']
  #allocation1 [shape = 'u32[72,128]{1,0:T(1,128)}', space=vmem, size = 0x9000, scoped, tag = 'internal scratch']
  %s0 = inlined_call_operand.vmem [shape: s32[16,1], index: 0, kind: input, shape index: {}]
  %s1 = inlined_call_operand.hbm [shape: f32[32,64], index: 1, kind: input, shape index: {}]
  %s2 = inlined_call_operand.hbm [shape: f32[16,64], index: 2, kind: output, shape index: {}]
  %s3 = sld [smem:[#allocation0]]
  $region45: #{plm_wrapper_forward.1} parent=0
    _
  %s5 = ssub.s32 1, %s3
  %s6 = scalar_select 0, %s5, %s3
  $region1: #{plm_wrapper_forward.1} parent=0
    #allocation2 [shape = 'u8[16384]{0}', space=vmem, size = 0x4000, scoped, tag = 'input window, operand 1, single buffered']
    #allocation3 [shape = 's32[2]{0}', space=sflag, size = 0x8, scoped, tag = 'scoped memory for plm_wrapper_forward.1']
    #allocation4 [shape = 's32[2]{0}', space=sflag, size = 0x8, scoped, tag = 'scoped memory for plm_wrapper_forward.1']
    #allocation5 [shape = 'u8[8192]{0}', space=vmem, size = 0x2000, scoped, tag = 'output window, operand 0']
    %7 = vsyncpa [#allocation3], 0
    %8 = vsyncpa [#allocation4], 0
    %s9 = scalar_lea.sflag [#allocation4], 1
    %10 = vsyncpa %s9, 0
    loop: start=0, step=1, limit=4
    $region2: #{plm_wrapper_forward.1} parent=1 // loop_pre_header
      _
    $region3: #{plm_wrapper_forward.1} parent=1 // loop_header
      %s12 = sphi 0, %s16
      %p13 = scmp.ge.s32.totalorder %s12, 4
      %s22 = sphi 0, %s24
      %s25 = sphi 0, %s22
      %s26 = sphi 0, %s25
      %s42 = sphi 0, %s26
      %s46 = sphi 0, %s46
      %s48 = sphi 0, %s46
      %s49 = sphi 0, %s48
      %s63 = sphi 0, %s49
      %s69 = sphi 0, %s71
      %s72 = sphi 0, %s69
      %s73 = sphi 0, %s72
      %s89 = sphi 0, %s73
    $region4: #{plm_wrapper_forward.1} parent=1 // loop_header_branch
      %15 = sbr.rel (%p13) target = $region8
    $region5: #{plm_wrapper_forward.1} parent=1 // loop_body
      %s17 = ssub.s32 %s12, 1
      %s18 = ssub.s32 %s12, 2
      %s19 = sadd.s32 %s12, 1
      %s20 = ssub.s32 %s12, %s19
      %p21 = scmp.eq.s32.totalorder %s20, 0
      %s23 = sadd.s32 %s22, 1
      %s24 = scalar_select %p21, %s22, %s23
      %p27 = pneg %p21
      %p28 = scmp.eq.s32.totalorder %s12, 1
      %p29 = por %p27, %p28
      %p30 = scmp.ne.s32.totalorder %s22, %s25
      %p31 = scmp.eq.s32.totalorder %s12, 0
      %p32 = por %p30, %p31
      %p33 = scmp.ne.s32.totalorder %s22, %s25
      %p34 = scmp.eq.s32.totalorder %s17, 1
      %p35 = por %p33, %p34
      %p36 = scmp.ne.s32.totalorder %s25, %s26
      %p37 = scmp.eq.s32.totalorder %s17, 0
      %p38 = por %p36, %p37
      %p39 = scmp.ne.s32.totalorder %s25, %s26
      %p40 = scmp.eq.s32.totalorder %s18, 1
      %p41 = por %p39, %p40
      %p43 = scmp.ne.s32.totalorder %s26, %s42
      %p44 = scmp.eq.s32.totalorder %s18, 0
      %p45 = por %p43, %p44
      %s47 = sadd.s32 %s46, 1
      %p50 = scmp.eq.s32.totalorder %s12, 1
      %p51 = scmp.ne.s32.totalorder %s46, %s48
      %p52 = scmp.eq.s32.totalorder %s12, 0
      %p53 = por %p51, %p52
      %p54 = scmp.ne.s32.totalorder %s46, %s48
      %p55 = scmp.eq.s32.totalorder %s17, 1
      %p56 = por %p54, %p55
      %p57 = scmp.ne.s32.totalorder %s48, %s49
      %p58 = scmp.eq.s32.totalorder %s17, 0
      %p59 = por %p57, %p58
      %p60 = scmp.ne.s32.totalorder %s48, %s49
      %p61 = scmp.eq.s32.totalorder %s18, 1
      %p62 = por %p60, %p61
      %p64 = scmp.ne.s32.totalorder %s49, %s63
      %p65 = scmp.eq.s32.totalorder %s18, 0
      %p66 = por %p64, %p65
      %s67 = ssub.s32 %s12, %s19
      %p68 = scmp.eq.s32.totalorder %s67, 0
      %s70 = sadd.s32 %s69, 1
      %s71 = scalar_select %p68, %s69, %s70
      %p74 = pneg %p68
      %p75 = scmp.eq.s32.totalorder %s12, 1
      %p76 = por %p74, %p75
      %p77 = scmp.ne.s32.totalorder %s69, %s72
      %p78 = scmp.eq.s32.totalorder %s12, 0
      %p79 = por %p77, %p78
      %p80 = scmp.ne.s32.totalorder %s69, %s72
      %p81 = scmp.eq.s32.totalorder %s17, 1
      %p82 = por %p80, %p81
      %p83 = scmp.ne.s32.totalorder %s72, %s73
      %p84 = scmp.eq.s32.totalorder %s17, 0
      %p85 = por %p83, %p84
      %p86 = scmp.ne.s32.totalorder %s72, %s73
      %p87 = scmp.eq.s32.totalorder %s18, 1
      %p88 = por %p86, %p87
      %p90 = scmp.ne.s32.totalorder %s73, %s89
      %p91 = scmp.eq.s32.totalorder %s18, 0
      %p92 = por %p90, %p91
      %p93 = scmp.le.s32.totalorder 1, %s12
      %p94 = scmp.lt.s32.totalorder %s12, 3
      %p95 = pnand %p93, %p94
      %p96 = pneg %p95
      // Predicated region
      $region9: #{plm_wrapper_forward.1} parent=5 // pred_check
        _
      $region10: #{plm_wrapper_forward.1} parent=5 // pred_check_branch
        %98 = sbr.rel (%p95) target = $region12
      $region11: #{plm_wrapper_forward.1} parent=5 // pred_region
        %s99 = ssub.s32 %s12, 1
        // Predicated region
        $region13: #{plm_wrapper_forward.1} parent=11 // pred_check
          %p100 = pneg %p59
        $region14: #{plm_wrapper_forward.1} parent=11 // pred_check_branch
          %102 = sbr.rel (%p100) target = $region16
        $region15: #{plm_wrapper_forward.1} parent=11 // pred_region
          %104 = vsyncadd [#allocation3], 0
          %s105 = sshll.u32 %s1, 4
          %s106 = int_to_ptr.hbm [resolvable:$true] %s105
          %s107 = sshll.u32 [#allocation2], 4
          %s108 = int_to_ptr.vmem [resolvable:$true] %s107
          %113 = dma.hbm_to_vmem [thread:$0]  %s106, 512, %s108, [#allocation3], 128, 128, 8
        $region16: #{plm_wrapper_forward.1} parent=11 // pred_fallthru
          _
      $region12: #{plm_wrapper_forward.1} parent=5 // pred_fallthru
        _
      %p114 = scmp.lt.s32.totalorder %s12, 2
      // Predicated region
      $region17: #{plm_wrapper_forward.1} parent=5 // pred_check
        %p115 = pneg %p114
      $region18: #{plm_wrapper_forward.1} parent=5 // pred_check_branch
        %117 = sbr.rel (%p115) target = $region20
      $region19: #{plm_wrapper_forward.1} parent=5 // pred_region
        // Predicated region
        $region21: #{plm_wrapper_forward.1} parent=19 // pred_check
          %p118 = pneg %p32
        $region22: #{plm_wrapper_forward.1} parent=19 // pred_check_branch
          %120 = sbr.rel (%p118) target = $region24
        $region23: #{plm_wrapper_forward.1} parent=19 // pred_region
          %p121 = scmp.lt.s32.totalorder %s12, 1
          %s122 = scalar_select %p121, %s12, 1
          %s123 = smul.addr %s122, 8
          %s124 = scalar_lea.vmem %s0, %s123
        $region24: #{plm_wrapper_forward.1} parent=19 // pred_fallthru
          _
      $region20: #{plm_wrapper_forward.1} parent=5 // pred_fallthru
        _
      %p125 = scmp.le.s32.totalorder 1, %s12
      %p126 = scmp.lt.s32.totalorder %s12, 3
      %p127 = pnand %p125, %p126
      %p128 = pneg %p127
      // Predicated region
      $region25: #{plm_wrapper_forward.1} parent=5 // pred_check
        _
      $region26: #{plm_wrapper_forward.1} parent=5 // pred_check_branch
        %130 = sbr.rel (%p127) target = $region28
      $region27: #{plm_wrapper_forward.1} parent=5 // pred_region
        %s131 = ssub.s32 %s12, 1
        // Predicated region
        $region29: #{plm_wrapper_forward.1} parent=27 // pred_check
          %p132 = pneg %p59
        $region30: #{plm_wrapper_forward.1} parent=27 // pred_check_branch
          %134 = sbr.rel (%p132) target = $region32
        $region31: #{plm_wrapper_forward.1} parent=27 // pred_region
          %136 = dma.done [#allocation3], 512
        $region32: #{plm_wrapper_forward.1} parent=27 // pred_fallthru
          _
        %p137 = scmp.lt.s32.totalorder %s17, 1
        %s138 = scalar_select %p137, %s17, 1
        %s139 = smul.addr %s138, 8
        %s140 = scalar_lea.vmem %s0, %s139
        %p141 = pneg %p38
        %p142 = pneg %p35
        %p143 = pneg %p59
        %p144 = pneg %p56
        %p145 = pneg %p85
        %p146 = pneg %p82
        %s147 = sand.u32 %s72, 1
        %s148 = scalar_lea.sflag [#allocation4], %s147
        %s149 = sand.u32 %s72, 1
        %s150 = smul.addr %s149, 8
        %s151 = scalar_lea.vmem [#allocation5], %s150
        %p152 = scmp.lt.s32.totalorder %s17, 1
        %s153 = scalar_select %p152, %s17, 1
        %s154 = smul.addr %s153, 8
        %s155 = scalar_lea.vmem %s0, %s154
        %v156 = vld [vmem:[%s155] sm:$0xff]
        %v157 = vlaneseq
        %v158 = vand.u32 %v157, 127
        %159 = vset.pattern.permute.xlu0 0
        %160 = vperm.xlu0 %159, %v156
        %v161 = vpop.permute.xlu0 %160
        %vm162 = vcmp.eq.s32.totalorder %v158, %v161
        %v163 = vsel %vm162, 1, 0
        %v164 = vcvt.s32.f32 %v163
        %v165 = vld [vmem:[#allocation2] sm:$0xff]
        %v166 = vld [vmem:[#allocation2 + $0x8] sm:$0xff]
        %v167 = vld [vmem:[#allocation2 + $0x10] sm:$0xff]
        %v168 = vld [vmem:[#allocation2 + $0x18] sm:$0xff]
        %vm169 = vcmask 261120
        %v171 = vsel %vm169, %v164, 0
        %173 = vmatpush.msra.mxu0 0.0
        %174 = vmatpush.msra.mxu0 0.0
        %175 = vmatpush.msra.mxu0 0.0
        %176 = vmatpush.msra.mxu0 0.0
        %177 = vmatpush.msra.mxu0 0.0
        %178 = vmatpush.msra.mxu0 0.0
        %179 = vmatpush.msra.mxu0 0.0
        %180 = vmatpush.msra.mxu0 0.0
        %181 = vmatpush.msra.mxu0 0.0
        %182 = vmatpush.msra.mxu0 0.0
        %183 = vmatpush.msra.mxu0 0.0
        %184 = vmatpush.msra.mxu0 0.0
        %185 = vmatpush.msra.mxu0 %v168
        %186 = vmatpush.msra.mxu0 %v167
        %187 = vmatpush.msra.mxu0 %v166
        %188 = vmatpush.msra.mxu0 %v165
        %189 = vmatmul.f32.gmra.mxu0 %v171
        %v190 = vpop.f32.mrf.mxu0
        %v191 = vadd.f32 0.0, %v190
        %192 = vdwg.mxu0
        %vm193 = vcmask 523264
        %194 = vst.msk [vmem:[%s151] sm:$0xff] %vm193, %v191
        %s195 = sand.u32 %s72, 1
        %s196 = scalar_lea.sflag [#allocation4], %s195
        %s197 = sand.u32 %s72, 1
        %s198 = smul.addr %s197, 8
        %s199 = scalar_lea.vmem [#allocation5], %s198
        // Predicated region
        $region33: #{plm_wrapper_forward.1} parent=27 // pred_check
          %p200 = pneg %p82
        $region34: #{plm_wrapper_forward.1} parent=27 // pred_check_branch
          %202 = sbr.rel (%p200) target = $region36
        $region35: #{plm_wrapper_forward.1} parent=27 // pred_region
          %204 = vsyncadd %s196, 0
          %s205 = smul.addr %s17, 8
          %s206 = scalar_lea.hbm %s2, %s205
          %s208 = sshll.u32 %s199, 4
          %s209 = int_to_ptr.vmem [resolvable:$true] %s208
          %s210 = sshll.u32 %s206, 4
          %s211 = int_to_ptr.hbm [resolvable:$true] %s210
          %213 = dma.vmem_to_hbm [thread:$0]  %s209, 128, %s211, %s196
        $region36: #{plm_wrapper_forward.1} parent=27 // pred_fallthru
          _
      $region28: #{plm_wrapper_forward.1} parent=5 // pred_fallthru
        _
      %p214 = scmp.le.s32.totalorder 2, %s12
      // Predicated region
      $region37: #{plm_wrapper_forward.1} parent=5 // pred_check
        %p215 = pneg %p214
      $region38: #{plm_wrapper_forward.1} parent=5 // pred_check_branch
        %217 = sbr.rel (%p215) target = $region40
      $region39: #{plm_wrapper_forward.1} parent=5 // pred_region
        %s218 = ssub.s32 %s12, 2
        // Predicated region
        $region41: #{plm_wrapper_forward.1} parent=39 // pred_check
          %p219 = pneg %p88
        $region42: #{plm_wrapper_forward.1} parent=39 // pred_check_branch
          %221 = sbr.rel (%p219) target = $region44
        $region43: #{plm_wrapper_forward.1} parent=39 // pred_region
          %s222 = sand.u32 %s73, 1
          %s223 = scalar_lea.sflag [#allocation4], %s222
          %s224 = sand.u32 %s73, 1
          %s225 = smul.addr %s224, 8
          %s226 = scalar_lea.vmem [#allocation5], %s225
          %228 = dma.done %s223, 128
        $region44: #{plm_wrapper_forward.1} parent=39 // pred_fallthru
          _
      $region40: #{plm_wrapper_forward.1} parent=5 // pred_fallthru
        _
    $region6: #{plm_wrapper_forward.1} parent=1 // loop_footer
      %s16 = sadd.s32 1, %s12
    $region7: #{plm_wrapper_forward.1} parent=1 // loop_footer_branch
      %11 = sbr.rel target = $region3
    $region8: #{plm_wrapper_forward.1} parent=1 // loop_exit
      _
    %229 = vsyncpa [#allocation3], 1
    %s230 = scalar_lea.sflag [#allocation3], 1
    %231 = vsyncpa %s230, 1
    %232 = vsyncpa [#allocation4], 1
    %s233 = scalar_lea.sflag [#allocation4], 1
    %234 = vsyncpa %s233, 1

</llo_original>
